<compile_context>
chip_gen: v5e
topology: v5e:2x2
jax: 0.10.0
libtpu: 0.0.40
codegen_flags: <defaults>
</compile_context>

<pallas_src>
import jax
import jax.numpy as jnp
from jax import lax
from jax.experimental import pallas as pl
from jax.experimental.pallas import tpu as pltpu


def _gcn_kernel(x_ref, at_ref, wt_ref, b2_ref, o_ref):
    # x_ref : (Tt, V, C_in)   bf16   activations, channels-last
    # at_ref: (V, V)          bf16   A^T  (at[w, v] == A[v, w])
    # wt_ref: (C_in, KC_pad)  bf16   1x1-conv weight, transposed + lane-padded
    # b2_ref: (V, KC_pad)     f32    colsum(A) (x) bias  (A-first bias folding)
    # o_ref : (Tt, V, KC_pad) f32
    Tt, V, C_in = x_ref.shape
    KCp = wt_ref.shape[-1]

    x = x_ref[...]                                         # (Tt, V, C_in) bf16

    # --- A-first graph contraction, batched over t (canonical bmk,bkn->bmn) ---
    # z[t, w, c] = sum_v A[v, w] * x[t, v, c]
    at_b = jnp.broadcast_to(at_ref[...], (Tt, V, V))       # (Tt, W, V) bf16
    z = lax.dot_general(
        at_b, x,
        dimension_numbers=(((2,), (1,)), ((0,), (0,))),
        preferred_element_type=jnp.float32,
    )                                                      # (Tt, V, C_in) f32

    # --- 1x1 conv on the MXU: one big (Tt*V, C_in) @ (C_in, KC_pad) matmul ---
    z2 = z.reshape(Tt * V, C_in).astype(x.dtype)           # leading-dim merge only
    o = jnp.dot(z2, wt_ref[...], preferred_element_type=jnp.float32)  # (Tt*V, KCp)

    # bias (already multiplied by colsum(A)) — broadcast over t; lane-dense store.
    o = o.reshape(Tt, V, KCp) + b2_ref[...][None, :, :]
    o_ref[...] = o.astype(o_ref.dtype)


def _pick_tt(T, n_batch, bytes_per_t, vmem_budget_bytes=40 * 1024 * 1024):
    """Largest divisor of T whose double-buffered x/out blocks fit the VMEM budget."""
    divisors = [d for d in range(T, 0, -1) if T % d == 0]
    tt = next((d for d in divisors if 2 * d * bytes_per_t <= vmem_budget_bytes),
              divisors[-1])
    # Keep at least 2 grid steps so v7x's second TensorCore has work.
    while n_batch * (T // tt) < 2 and tt > 1:
        tt = next(d for d in divisors if d < tt)
    return tt


def conv_temporal_graphical(x_nchw, A, weight, bias, kernel_size):
    """x_nchw: (N, C_in, T, V); A: (V, V); weight: (K*C_out, C_in); bias: (K*C_out,)."""
    N, C_in, T, V = x_nchw.shape
    KC = weight.shape[0]
    assert A.shape == (V, V)
    assert KC % kernel_size == 0

    cdt = jnp.bfloat16                                 # MXU compute dtype (f32 accum)
    KC_pad = ((KC + 127) // 128) * 128                 # lane-dense output width

    # per-t VMEM bytes: x tile (bf16) + out tile (f32); weights/A/bias are resident.
    bytes_per_t = V * C_in * 2 + V * KC_pad * 4
    Tt = _pick_tt(T, N, bytes_per_t)

    # --- layout glue (disappears in a channels-last end-to-end model) ---
    x_ntvc = jnp.transpose(x_nchw, (0, 2, 3, 1)).astype(cdt)          # (N, T, V, C_in)
    at = jnp.transpose(A, (1, 0)).astype(cdt)                          # A^T, (W, V)
    wt = jnp.zeros((C_in, KC_pad), cdt).at[:, :KC].set(
        jnp.transpose(weight, (1, 0)).astype(cdt))                     # (C_in, KC_pad)
    # A applied before the conv => bias becomes colsum(A) (x) bias (rank-1, f32).
    col_a = jnp.sum(A, axis=0).astype(jnp.float32)                     # (V,)
    b2 = jnp.zeros((V, KC_pad), jnp.float32).at[:, :KC].set(
        col_a[:, None] * bias[None, :].astype(jnp.float32))            # (V, KC_pad)

    out_ntvk = pl.pallas_call(
        _gcn_kernel,
        out_shape=jax.ShapeDtypeStruct((N, T, V, KC_pad), jnp.float32),
        grid_spec=pltpu.PrefetchScalarGridSpec(
            num_scalar_prefetch=0,
            grid=(N, T // Tt),
            in_specs=[
                # x: fused (Tt, V, C_in) slab per step.
                # NOTE: add pipeline_mode=pl.Buffered(3) here only if profiling shows
                # the x DMA still exposed after the block enlargement.
                pl.BlockSpec((None, Tt, V, C_in), lambda n, tb: (n, tb, 0, 0)),
                pl.BlockSpec((V, V), lambda n, tb: (0, 0)),            # A^T (resident)
                pl.BlockSpec((C_in, KC_pad), lambda n, tb: (0, 0)),    # Wt  (resident)
                pl.BlockSpec((V, KC_pad), lambda n, tb: (0, 0)),       # bias (resident)
            ],
            out_specs=pl.BlockSpec((None, Tt, V, KC_pad), lambda n, tb: (n, tb, 0, 0)),
        ),
        compiler_params=pltpu.CompilerParams(
            dimension_semantics=("parallel", "parallel"),
            vmem_limit_bytes=48 * 1024 * 1024,   # headroom within v7x's 64 MiB VMEM
        ),
    )(x_ntvc, at, wt, b2)

    # --- glue back to the PyTorch NCHW contract (a channels-last consumer would take
    #     out_ntvk[..., :KC] directly and skip this transpose). ---
    out_nchw = jnp.transpose(out_ntvk[..., :KC], (0, 3, 1, 2))         # (N, KC, T, V)
    return out_nchw, A


def _reference(x_nchw, A, weight, bias):
    # pure-JAX f32 reference mirroring the PyTorch forward
    y = jnp.einsum('nctv,oc->notv', x_nchw, weight) + bias[None, :, None, None]
    return jnp.einsum('notv,vw->notw', y, A)


if __name__ == "__main__":
    # toy shapes: N=2, C_in=4, C_out=8, kernel_size(K)=3, T=8, V=16
    N, C_in, C_out, K, T, V = 2, 4, 8, 3, 8, 16
    KC = C_out * K

    key = jax.random.PRNGKey(0)
    kx, ka, kw, kb = jax.random.split(key, 4)
    x = jax.random.normal(kx, (N, C_in, T, V), dtype=jnp.float32)
    A = jax.random.normal(ka, (V, V), dtype=jnp.float32)
    weight = jax.random.normal(kw, (KC, C_in), dtype=jnp.float32) * 0.1
    bias = jax.random.normal(kb, (KC,), dtype=jnp.float32) * 0.1

    out, A_out = conv_temporal_graphical(x, A, weight, bias, kernel_size=K)
    out = jax.block_until_ready(out)

    ref = _reference(x, A, weight, bias)
    assert out.shape == (N, KC, T, V), out.shape
    rel = float(jnp.linalg.norm(out - ref) / jnp.linalg.norm(ref))
    assert rel < 1e-2, f"relative error too large: {rel}"
    # bf16 MXU inputs -> loosened elementwise tolerance vs the f32 reference
    assert bool(jnp.allclose(out, ref, atol=5e-2, rtol=5e-2)), "mismatch vs reference"
    assert jnp.array_equal(A_out, A)

    print("KERNEL_OK")
</pallas_src>

<mosaic_0001>
module attributes {stable_mosaic.version = 11 : i64} {
  func.func @_gcn_kernel(%arg0: i32, %arg1: i32, %arg2: memref<1x8x16x4xbf16, #tpu.memory_space<vmem>>, %arg3: memref<16x16xbf16, #tpu.memory_space<vmem>>, %arg4: memref<4x128xbf16, #tpu.memory_space<vmem>>, %arg5: memref<16x128xf32, #tpu.memory_space<vmem>>, %arg6: memref<1x8x16x128xf32, #tpu.memory_space<vmem>>) attributes {dimension_semantics = [#tpu.dimension_semantics<parallel>, #tpu.dimension_semantics<parallel>], iteration_bounds = array<i64: 2, 1>, scalar_prefetch = 0 : i64, scratch_operands = 0 : i64, tpu.core_type = #tpu.core_type<tc>, window_params = [{transform_indices = @transform_0, window_bounds = array<i64: 1, 8, 16, 4>}, {pipeline_mode = #tpu.pipeline_mode<synchronous>, transform_indices = @transform_1, window_bounds = array<i64: 16, 16>}, {pipeline_mode = #tpu.pipeline_mode<synchronous>, transform_indices = @transform_2, window_bounds = array<i64: 4, 128>}, {pipeline_mode = #tpu.pipeline_mode<synchronous>, transform_indices = @transform_3, window_bounds = array<i64: 16, 128>}, {transform_indices = @transform_4, window_bounds = array<i64: 1, 8, 16, 128>}]} {
    %c0 = arith.constant 0 : index
    %c0_0 = arith.constant 0 : index
    %c0_1 = arith.constant 0 : index
    %c0_2 = arith.constant 0 : index
    %0 = vector.load %arg2[%c0, %c0_0, %c0_1, %c0_2] : memref<1x8x16x4xbf16, #tpu.memory_space<vmem>>, vector<1x8x16x4xbf16>
    %1 = vector.shape_cast %0 : vector<1x8x16x4xbf16> to vector<8x16x4xbf16>
    %c0_3 = arith.constant 0 : index
    %c0_4 = arith.constant 0 : index
    %2 = vector.load %arg3[%c0_3, %c0_4] : memref<16x16xbf16, #tpu.memory_space<vmem>>, vector<16x16xbf16>
    %3 = vector.shape_cast %2 : vector<16x16xbf16> to vector<1x16x16xbf16>
    %4 = vector.broadcast %3 : vector<1x16x16xbf16> to vector<8x16x16xbf16>
    %cst = arith.constant dense<0.000000e+00> : vector<8x16x4xf32>
    %5 = tpu.matmul %4, %1, %cst {dimension_numbers = #tpu.dot_dimension_numbers<[2], [1], [1], [2], [0, 0, 0, 1, 1, 2], [0], [0]>} : vector<8x16x16xbf16>, vector<8x16x4xbf16>, vector<8x16x4xf32> -> vector<8x16x4xf32>
    %6 = vector.shape_cast %5 : vector<8x16x4xf32> to vector<128x4xf32>
    %7 = arith.truncf %6 : vector<128x4xf32> to vector<128x4xbf16>
    %c0_5 = arith.constant 0 : index
    %c0_6 = arith.constant 0 : index
    %8 = vector.load %arg4[%c0_5, %c0_6] : memref<4x128xbf16, #tpu.memory_space<vmem>>, vector<4x128xbf16>
    %cst_7 = arith.constant dense<0.000000e+00> : vector<128x128xf32>
    %9 = tpu.matmul %7, %8, %cst_7 {dimension_numbers = #tpu.dot_dimension_numbers<[1], [0], [0], [1], [0, 0, 1, 1], [], []>} : vector<128x4xbf16>, vector<4x128xbf16>, vector<128x128xf32> -> vector<128x128xf32>
    %10 = vector.shape_cast %9 : vector<128x128xf32> to vector<8x16x128xf32>
    %c0_8 = arith.constant 0 : index
    %c0_9 = arith.constant 0 : index
    %11 = vector.load %arg5[%c0_8, %c0_9] : memref<16x128xf32, #tpu.memory_space<vmem>>, vector<16x128xf32>
    %12 = vector.shape_cast %11 : vector<16x128xf32> to vector<1x16x128xf32>
    %13 = vector.broadcast %12 : vector<1x16x128xf32> to vector<8x16x128xf32>
    %14 = arith.addf %10, %13 : vector<8x16x128xf32>
    %c0_10 = arith.constant 0 : index
    %c0_11 = arith.constant 0 : index
    %c0_12 = arith.constant 0 : index
    %c0_13 = arith.constant 0 : index
    %15 = vector.load %arg6[%c0_10, %c0_11, %c0_12, %c0_13] : memref<1x8x16x128xf32, #tpu.memory_space<vmem>>, vector<1x8x16x128xf32>
    %16 = vector.shape_cast %15 : vector<1x8x16x128xf32> to vector<8x16x128xf32>
    %17 = vector.shape_cast %14 : vector<8x16x128xf32> to vector<1x8x16x128xf32>
    tpu.vector_store %arg6[%c0_10, %c0_11, %c0_12, %c0_13], %17 {strides = array<i32>} : memref<1x8x16x128xf32, #tpu.memory_space<vmem>>, vector<1x8x16x128xf32>,
    return
  }
  func.func @transform_0(%arg0: i32, %arg1: i32) -> (i32, i32, i32, i32) {
    %c0_i32 = arith.constant 0 : i32
    %c0_i32_0 = arith.constant 0 : i32
    %c0_i32_1 = arith.constant 0 : i32
    return %arg0, %arg1, %c0_i32, %c0_i32_0 : i32, i32, i32, i32
  }
  func.func @transform_1(%arg0: i32, %arg1: i32) -> (i32, i32) {
    %c0_i32 = arith.constant 0 : i32
    %c0_i32_0 = arith.constant 0 : i32
    %c0_i32_1 = arith.constant 0 : i32
    return %c0_i32, %c0_i32_0 : i32, i32
  }
  func.func @transform_2(%arg0: i32, %arg1: i32) -> (i32, i32) {
    %c0_i32 = arith.constant 0 : i32
    %c0_i32_0 = arith.constant 0 : i32
    %c0_i32_1 = arith.constant 0 : i32
    return %c0_i32, %c0_i32_0 : i32, i32
  }
  func.func @transform_3(%arg0: i32, %arg1: i32) -> (i32, i32) {
    %c0_i32 = arith.constant 0 : i32
    %c0_i32_0 = arith.constant 0 : i32
    %c0_i32_1 = arith.constant 0 : i32
    return %c0_i32, %c0_i32_0 : i32, i32
  }
  func.func @transform_4(%arg0: i32, %arg1: i32) -> (i32, i32, i32, i32) {
    %c0_i32 = arith.constant 0 : i32
    %c0_i32_0 = arith.constant 0 : i32
    %c0_i32_1 = arith.constant 0 : i32
    return %arg0, %arg1, %c0_i32, %c0_i32_0 : i32, i32, i32, i32
  }
}

</mosaic_0001>

<llo_original>
// kernel: tpu_custom_call.1
$region0: #{tpu_custom_call.1}
  #allocation0 [shape = 'u32[]', space=smem, size = 0x4, offset = 0x4, fixed_abs, tag = 'smem constant byte address 0x4 - core index']
  #allocation1 [shape = 'u32[72,128]{1,0:T(1,128)}', space=vmem, size = 0x9000, scoped, tag = 'internal scratch']
  %s0 = inlined_call_operand.vmem [shape: bf16[2,8,16,4], index: 0, kind: input, shape index: {}]
  %s1 = inlined_call_operand.vmem [shape: bf16[16,16], index: 1, kind: input, shape index: {}]
  %s2 = inlined_call_operand.vmem [shape: bf16[4,128], index: 2, kind: input, shape index: {}]
  %s3 = inlined_call_operand.vmem [shape: f32[16,128], index: 3, kind: input, shape index: {}]
  %s4 = inlined_call_operand.hbm [shape: f32[2,8,16,128], index: 4, kind: output, shape index: {}]
  %s5 = sld [smem:[#allocation0]]
  $region49: #{tpu_custom_call.1} parent=0
    _
  %s7 = ssub.s32 1, %s5
  %s8 = scalar_select 0, %s7, %s5
  $region1: #{tpu_custom_call.1} parent=0
    #allocation2 [shape = 'u8[131072]{0}', space=vmem, size = 0x20000, scoped, tag = 'output window, operand 0']
    #allocation3 [shape = 's32[2]{0}', space=sflag, size = 0x8, scoped, tag = 'scoped memory for tpu_custom_call.1']
    %9 = vsyncpa [#allocation3], 0
    %s10 = scalar_lea.sflag [#allocation3], 1
    %11 = vsyncpa %s10, 0
    loop: start=0, step=1, limit=4
    $region2: #{tpu_custom_call.1} parent=1 // loop_pre_header
      _
    $region3: #{tpu_custom_call.1} parent=1 // loop_header
      %s13 = sphi 0, %s17
      %p14 = scmp.ge.s32.totalorder %s13, 4
      %s20 = sphi 0, %s32
      %s21 = sphi 0, %s28
      %s22 = sphi 0, %s20
      %s23 = sphi 0, %s21
      %s24 = sphi 0, %s22
      %s25 = sphi 0, %s23
      %s37 = sphi 0, %s39
      %s40 = sphi 0, %s37
      %s41 = sphi 0, %s40
      %s57 = sphi 0, %s41
      %s61 = sphi 0, %s61
      %s63 = sphi 0, %s61
      %s64 = sphi 0, %s63
      %s78 = sphi 0, %s64
      %s82 = sphi 0, %s82
      %s84 = sphi 0, %s82
      %s85 = sphi 0, %s84
      %s99 = sphi 0, %s85
      %s103 = sphi 0, %s103
      %s105 = sphi 0, %s103
      %s106 = sphi 0, %s105
      %s120 = sphi 0, %s106
      %s128 = sphi 0, %s130
      %s131 = sphi 0, %s128
      %s132 = sphi 0, %s131
      %s148 = sphi 0, %s132
    $region4: #{tpu_custom_call.1} parent=1 // loop_header_branch
      %16 = sbr.rel (%p14) target = $region8
    $region5: #{tpu_custom_call.1} parent=1 // loop_body
      %s18 = ssub.s32 %s13, 1
      %s19 = ssub.s32 %s13, 2
      %s26 = sadd.s32 1, %s21
      %p27 = scmp.ge.s32.totalorder %s26, 1
      %s28 = scalar_select %p27, 0, %s26
      %s29 = sadd.s32 1, %s20
      %s30 = scalar_select %p27, %s29, %s20
      %p31 = scmp.ge.s32.totalorder %s30, 2
      %s32 = scalar_select %p31, 0, %s30
      %s33 = ssub.s32 %s20, %s32
      %s34 = ssub.s32 %s21, %s28
      %s35 = sor.u32 %s33, %s34
      %p36 = scmp.eq.s32.totalorder %s35, 0
      %s38 = sadd.s32 %s37, 1
      %s39 = scalar_select %p36, %s37, %s38
      %p42 = pneg %p36
      %p43 = scmp.eq.s32.totalorder %s13, 1
      %p44 = por %p42, %p43
      %p45 = scmp.ne.s32.totalorder %s37, %s40
      %p46 = scmp.eq.s32.totalorder %s13, 0
      %p47 = por %p45, %p46
      %p48 = scmp.ne.s32.totalorder %s37, %s40
      %p49 = scmp.eq.s32.totalorder %s18, 1
      %p50 = por %p48, %p49
      %p51 = scmp.ne.s32.totalorder %s40, %s41
      %p52 = scmp.eq.s32.totalorder %s18, 0
      %p53 = por %p51, %p52
      %p54 = scmp.ne.s32.totalorder %s40, %s41
      %p55 = scmp.eq.s32.totalorder %s19, 1
      %p56 = por %p54, %p55
      %p58 = scmp.ne.s32.totalorder %s41, %s57
      %p59 = scmp.eq.s32.totalorder %s19, 0
      %p60 = por %p58, %p59
      %s62 = sadd.s32 %s61, 1
      %p65 = scmp.eq.s32.totalorder %s13, 1
      %p66 = scmp.ne.s32.totalorder %s61, %s63
      %p67 = scmp.eq.s32.totalorder %s13, 0
      %p68 = por %p66, %p67
      %p69 = scmp.ne.s32.totalorder %s61, %s63
      %p70 = scmp.eq.s32.totalorder %s18, 1
      %p71 = por %p69, %p70
      %p72 = scmp.ne.s32.totalorder %s63, %s64
      %p73 = scmp.eq.s32.totalorder %s18, 0
      %p74 = por %p72, %p73
      %p75 = scmp.ne.s32.totalorder %s63, %s64
      %p76 = scmp.eq.s32.totalorder %s19, 1
      %p77 = por %p75, %p76
      %p79 = scmp.ne.s32.totalorder %s64, %s78
      %p80 = scmp.eq.s32.totalorder %s19, 0
      %p81 = por %p79, %p80
      %s83 = sadd.s32 %s82, 1
      %p86 = scmp.eq.s32.totalorder %s13, 1
      %p87 = scmp.ne.s32.totalorder %s82, %s84
      %p88 = scmp.eq.s32.totalorder %s13, 0
      %p89 = por %p87, %p88
      %p90 = scmp.ne.s32.totalorder %s82, %s84
      %p91 = scmp.eq.s32.totalorder %s18, 1
      %p92 = por %p90, %p91
      %p93 = scmp.ne.s32.totalorder %s84, %s85
      %p94 = scmp.eq.s32.totalorder %s18, 0
      %p95 = por %p93, %p94
      %p96 = scmp.ne.s32.totalorder %s84, %s85
      %p97 = scmp.eq.s32.totalorder %s19, 1
      %p98 = por %p96, %p97
      %p100 = scmp.ne.s32.totalorder %s85, %s99
      %p101 = scmp.eq.s32.totalorder %s19, 0
      %p102 = por %p100, %p101
      %s104 = sadd.s32 %s103, 1
      %p107 = scmp.eq.s32.totalorder %s13, 1
      %p108 = scmp.ne.s32.totalorder %s103, %s105
      %p109 = scmp.eq.s32.totalorder %s13, 0
      %p110 = por %p108, %p109
      %p111 = scmp.ne.s32.totalorder %s103, %s105
      %p112 = scmp.eq.s32.totalorder %s18, 1
      %p113 = por %p111, %p112
      %p114 = scmp.ne.s32.totalorder %s105, %s106
      %p115 = scmp.eq.s32.totalorder %s18, 0
      %p116 = por %p114, %p115
      %p117 = scmp.ne.s32.totalorder %s105, %s106
      %p118 = scmp.eq.s32.totalorder %s19, 1
      %p119 = por %p117, %p118
      %p121 = scmp.ne.s32.totalorder %s106, %s120
      %p122 = scmp.eq.s32.totalorder %s19, 0
      %p123 = por %p121, %p122
      %s124 = ssub.s32 %s20, %s32
      %s125 = ssub.s32 %s21, %s28
      %s126 = sor.u32 %s124, %s125
      %p127 = scmp.eq.s32.totalorder %s126, 0
      %s129 = sadd.s32 %s128, 1
      %s130 = scalar_select %p127, %s128, %s129
      %p133 = pneg %p127
      %p134 = scmp.eq.s32.totalorder %s13, 1
      %p135 = por %p133, %p134
      %p136 = scmp.ne.s32.totalorder %s128, %s131
      %p137 = scmp.eq.s32.totalorder %s13, 0
      %p138 = por %p136, %p137
      %p139 = scmp.ne.s32.totalorder %s128, %s131
      %p140 = scmp.eq.s32.totalorder %s18, 1
      %p141 = por %p139, %p140
      %p142 = scmp.ne.s32.totalorder %s131, %s132
      %p143 = scmp.eq.s32.totalorder %s18, 0
      %p144 = por %p142, %p143
      %p145 = scmp.ne.s32.totalorder %s131, %s132
      %p146 = scmp.eq.s32.totalorder %s19, 1
      %p147 = por %p145, %p146
      %p149 = scmp.ne.s32.totalorder %s132, %s148
      %p150 = scmp.eq.s32.totalorder %s19, 0
      %p151 = por %p149, %p150
      %p152 = scmp.le.s32.totalorder 1, %s13
      %p153 = scmp.lt.s32.totalorder %s13, 3
      %p154 = pnand %p152, %p153
      %p155 = pneg %p154
      // Predicated region
      $region9: #{tpu_custom_call.1} parent=5 // pred_check
        _
      $region10: #{tpu_custom_call.1} parent=5 // pred_check_branch
        %157 = sbr.rel (%p154) target = $region12
      $region11: #{tpu_custom_call.1} parent=5 // pred_region
        %s158 = ssub.s32 %s13, 1
        // Predicated region
        $region13: #{tpu_custom_call.1} parent=11 // pred_check
          %p159 = pneg %p74
        $region14: #{tpu_custom_call.1} parent=11 // pred_check_branch
          %161 = sbr.rel (%p159) target = $region16
        $region15: #{tpu_custom_call.1} parent=11 // pred_region
          _
        $region16: #{tpu_custom_call.1} parent=11 // pred_fallthru
          _
        // Predicated region
        $region17: #{tpu_custom_call.1} parent=11 // pred_check
          %p162 = pneg %p95
        $region18: #{tpu_custom_call.1} parent=11 // pred_check_branch
          %164 = sbr.rel (%p162) target = $region20
        $region19: #{tpu_custom_call.1} parent=11 // pred_region
          _
        $region20: #{tpu_custom_call.1} parent=11 // pred_fallthru
          _
        // Predicated region
        $region21: #{tpu_custom_call.1} parent=11 // pred_check
          %p165 = pneg %p116
        $region22: #{tpu_custom_call.1} parent=11 // pred_check_branch
          %167 = sbr.rel (%p165) target = $region24
        $region23: #{tpu_custom_call.1} parent=11 // pred_region
          _
        $region24: #{tpu_custom_call.1} parent=11 // pred_fallthru
          _
      $region12: #{tpu_custom_call.1} parent=5 // pred_fallthru
        _
      %p168 = scmp.lt.s32.totalorder %s13, 2
      // Predicated region
      $region25: #{tpu_custom_call.1} parent=5 // pred_check
        %p169 = pneg %p168
      $region26: #{tpu_custom_call.1} parent=5 // pred_check_branch
        %171 = sbr.rel (%p169) target = $region28
      $region27: #{tpu_custom_call.1} parent=5 // pred_region
        // Predicated region
        $region29: #{tpu_custom_call.1} parent=27 // pred_check
          %p172 = pneg %p47
        $region30: #{tpu_custom_call.1} parent=27 // pred_check_branch
          %174 = sbr.rel (%p172) target = $region32
        $region31: #{tpu_custom_call.1} parent=27 // pred_region
          %s175 = smul.u32 8, %s21
          %p176 = scmp.lt.s32.totalorder %s20, 1
          %s177 = scalar_select %p176, %s20, 1
          %p178 = scmp.lt.s32.totalorder %s175, 7
          %s179 = scalar_select %p178, %s175, 7
          %s180 = smul.addr %s179, 2
          %s181 = smul.addr %s177, 16
          %s182 = sadd.s32 %s180, %s181
          %s183 = smul.addr %s182, 4
          %s184 = scalar_lea.vmem %s0, %s183
          %s185 = smul.u32 8, %s21
        $region32: #{tpu_custom_call.1} parent=27 // pred_fallthru
          _
      $region28: #{tpu_custom_call.1} parent=5 // pred_fallthru
        _
      %p186 = scmp.le.s32.totalorder 1, %s13
      %p187 = scmp.lt.s32.totalorder %s13, 3
      %p188 = pnand %p186, %p187
      %p189 = pneg %p188
      // Predicated region
      $region33: #{tpu_custom_call.1} parent=5 // pred_check
        _
      $region34: #{tpu_custom_call.1} parent=5 // pred_check_branch
        %191 = sbr.rel (%p188) target = $region36
      $region35: #{tpu_custom_call.1} parent=5 // pred_region
        %s192 = ssub.s32 %s13, 1
        %s193 = smul.u32 8, %s23
        %p194 = scmp.lt.s32.totalorder %s22, 1
        %s195 = scalar_select %p194, %s22, 1
        %p196 = scmp.lt.s32.totalorder %s193, 7
        %s197 = scalar_select %p196, %s193, 7
        %s198 = smul.addr %s197, 2
        %s199 = smul.addr %s195, 16
        %s200 = sadd.s32 %s198, %s199
        %s201 = smul.addr %s200, 4
        %s202 = scalar_lea.vmem %s0, %s201
        %p203 = pneg %p53
        %p204 = pneg %p50
        %p205 = pneg %p74
        %p206 = pneg %p71
        %p207 = pneg %p95
        %p208 = pneg %p92
        %p209 = pneg %p116
        %p210 = pneg %p113
        %p211 = pneg %p144
        %p212 = pneg %p141
        %s213 = sand.u32 %s131, 1
        %s214 = scalar_lea.sflag [#allocation3], %s213
        %s215 = sand.u32 %s131, 1
        %s216 = smul.addr %s215, 128
        %s217 = scalar_lea.vmem [#allocation2], %s216
        %s218 = smul.u32 8, %s23
        %p219 = scmp.lt.s32.totalorder %s22, 1
        %s220 = scalar_select %p219, %s22, 1
        %p221 = scmp.lt.s32.totalorder %s218, 7
        %s222 = scalar_select %p221, %s218, 7
        %s223 = smul.addr %s222, 2
        %s224 = smul.addr %s220, 16
        %s225 = sadd.s32 %s223, %s224
        %s226 = smul.addr %s225, 4
        %s227 = scalar_lea.vmem %s0, %s226
        %s228 = smul.u32 8, %s23
        %s229 = smul.u32 8, %s23
        %v231 = vld [vmem:[%s227] sm:$0xf]
        %v232 = vld [vmem:[%s227 + $0x4] sm:$0xf]
        %v233 = vld [vmem:[%s227 + $0x8] sm:$0xf]
        %v234 = vld [vmem:[%s227 + $0xc] sm:$0xf]
        %v235 = vld [vmem:[%s227 + $0x10] sm:$0xf]
        %v236 = vld [vmem:[%s227 + $0x14] sm:$0xf]
        %v237 = vld [vmem:[%s227 + $0x18] sm:$0xf]
        %v238 = vld [vmem:[%s227 + $0x1c] sm:$0xf]
        %v239 = vld [vmem:[%s227 + $0x20] sm:$0xf]
        %v240 = vld [vmem:[%s227 + $0x24] sm:$0xf]
        %v241 = vld [vmem:[%s227 + $0x28] sm:$0xf]
        %v242 = vld [vmem:[%s227 + $0x2c] sm:$0xf]
        %v243 = vld [vmem:[%s227 + $0x30] sm:$0xf]
        %v244 = vld [vmem:[%s227 + $0x34] sm:$0xf]
        %v245 = vld [vmem:[%s227 + $0x38] sm:$0xf]
        %v246 = vld [vmem:[%s227 + $0x3c] sm:$0xf]
        %v247 = vld [vmem:[%s1] sm:$0xf]
        %v248 = vld [vmem:[%s1 + $0x4] sm:$0xf]
        %v251 = vunpack.c.l.b16 %v247
        %v252 = vunpack.c.l.b16 %v248
        %v253 = vpack.c.b16 %v252, %v251
        %v256 = vunpack.c.l.b16 %v231
        %v257 = vunpack.c.l.b16 %v232
        %v258 = vpack.c.b16 %v257, %v256
        %vm260 = vcmask 130048
        %v262 = vsel %vm260, %v253, 0
        %264 = vmatpush.bf16.msra.mxu0 0
        %265 = vmatpush.bf16.msra.mxu0 0
        %266 = vmatpush.bf16.msra.mxu0 0
        %267 = vmatpush.bf16.msra.mxu0 0
        %268 = vmatpush.bf16.msra.mxu0 0
        %269 = vmatpush.bf16.msra.mxu0 0
        %270 = vmatpush.bf16.msra.mxu0 0
        %271 = vmatpush.bf16.msra.mxu0 %v258
        %272 = vmatmul.bf16.gmra.mxu0 %v262
        %v273 = vpop.f32.mrf.mxu0
        %v274 = vadd.f32 0.0, %v273
        %v275 = vpop.f32.mrf.mxu0
        %v276 = vadd.f32 0.0, %v275
        %277 = vdwg.mxu0
        %v280 = vunpack.c.l.b16 %v233
        %v281 = vunpack.c.l.b16 %v234
        %v282 = vpack.c.b16 %v281, %v280
        %284 = vmatpush.bf16.msra.mxu0 0
        %285 = vmatpush.bf16.msra.mxu0 0
        %286 = vmatpush.bf16.msra.mxu0 0
        %287 = vmatpush.bf16.msra.mxu0 0
        %288 = vmatpush.bf16.msra.mxu0 0
        %289 = vmatpush.bf16.msra.mxu0 0
        %290 = vmatpush.bf16.msra.mxu0 0
        %291 = vmatpush.bf16.msra.mxu0 %v282
        %292 = vmatmul.bf16.gmra.mxu0 %v262
        %v293 = vpop.f32.mrf.mxu0
        %v294 = vadd.f32 0.0, %v293
        %v295 = vpop.f32.mrf.mxu0
        %v296 = vadd.f32 0.0, %v295
        %297 = vdwg.mxu0
        %v300 = vunpack.c.l.b16 %v235
        %v301 = vunpack.c.l.b16 %v236
        %v302 = vpack.c.b16 %v301, %v300
        %304 = vmatpush.bf16.msra.mxu0 0
        %305 = vmatpush.bf16.msra.mxu0 0
        %306 = vmatpush.bf16.msra.mxu0 0
        %307 = vmatpush.bf16.msra.mxu0 0
        %308 = vmatpush.bf16.msra.mxu0 0
        %309 = vmatpush.bf16.msra.mxu0 0
        %310 = vmatpush.bf16.msra.mxu0 0
        %311 = vmatpush.bf16.msra.mxu0 %v302
        %312 = vmatmul.bf16.gmra.mxu0 %v262
        %v313 = vpop.f32.mrf.mxu0
        %v314 = vadd.f32 0.0, %v313
        %v315 = vpop.f32.mrf.mxu0
        %v316 = vadd.f32 0.0, %v315
        %317 = vdwg.mxu0
        %v320 = vunpack.c.l.b16 %v237
        %v321 = vunpack.c.l.b16 %v238
        %v322 = vpack.c.b16 %v321, %v320
        %324 = vmatpush.bf16.msra.mxu0 0
        %325 = vmatpush.bf16.msra.mxu0 0
        %326 = vmatpush.bf16.msra.mxu0 0
        %327 = vmatpush.bf16.msra.mxu0 0
        %328 = vmatpush.bf16.msra.mxu0 0
        %329 = vmatpush.bf16.msra.mxu0 0
        %330 = vmatpush.bf16.msra.mxu0 0
        %331 = vmatpush.bf16.msra.mxu0 %v322
        %332 = vmatmul.bf16.gmra.mxu0 %v262
        %v333 = vpop.f32.mrf.mxu0
        %v334 = vadd.f32 0.0, %v333
        %v335 = vpop.f32.mrf.mxu0
        %v336 = vadd.f32 0.0, %v335
        %337 = vdwg.mxu0
        %v340 = vunpack.c.l.b16 %v239
        %v341 = vunpack.c.l.b16 %v240
        %v342 = vpack.c.b16 %v341, %v340
        %344 = vmatpush.bf16.msra.mxu0 0
        %345 = vmatpush.bf16.msra.mxu0 0
        %346 = vmatpush.bf16.msra.mxu0 0
        %347 = vmatpush.bf16.msra.mxu0 0
        %348 = vmatpush.bf16.msra.mxu0 0
        %349 = vmatpush.bf16.msra.mxu0 0
        %350 = vmatpush.bf16.msra.mxu0 0
        %351 = vmatpush.bf16.msra.mxu0 %v342
        %352 = vmatmul.bf16.gmra.mxu0 %v262
        %v353 = vpop.f32.mrf.mxu0
        %v354 = vadd.f32 0.0, %v353
        %v355 = vpop.f32.mrf.mxu0
        %v356 = vadd.f32 0.0, %v355
        %357 = vdwg.mxu0
        %v360 = vunpack.c.l.b16 %v241
        %v361 = vunpack.c.l.b16 %v242
        %v362 = vpack.c.b16 %v361, %v360
        %364 = vmatpush.bf16.msra.mxu0 0
        %365 = vmatpush.bf16.msra.mxu0 0
        %366 = vmatpush.bf16.msra.mxu0 0
        %367 = vmatpush.bf16.msra.mxu0 0
        %368 = vmatpush.bf16.msra.mxu0 0
        %369 = vmatpush.bf16.msra.mxu0 0
        %370 = vmatpush.bf16.msra.mxu0 0
        %371 = vmatpush.bf16.msra.mxu0 %v362
        %372 = vmatmul.bf16.gmra.mxu0 %v262
        %v373 = vpop.f32.mrf.mxu0
        %v374 = vadd.f32 0.0, %v373
        %v375 = vpop.f32.mrf.mxu0
        %v376 = vadd.f32 0.0, %v375
        %377 = vdwg.mxu0
        %v380 = vunpack.c.l.b16 %v243
        %v381 = vunpack.c.l.b16 %v244
        %v382 = vpack.c.b16 %v381, %v380
        %384 = vmatpush.bf16.msra.mxu0 0
        %385 = vmatpush.bf16.msra.mxu0 0
        %386 = vmatpush.bf16.msra.mxu0 0
        %387 = vmatpush.bf16.msra.mxu0 0
        %388 = vmatpush.bf16.msra.mxu0 0
        %389 = vmatpush.bf16.msra.mxu0 0
        %390 = vmatpush.bf16.msra.mxu0 0
        %391 = vmatpush.bf16.msra.mxu0 %v382
        %392 = vmatmul.bf16.gmra.mxu0 %v262
        %v393 = vpop.f32.mrf.mxu0
        %v394 = vadd.f32 0.0, %v393
        %v395 = vpop.f32.mrf.mxu0
        %v396 = vadd.f32 0.0, %v395
        %397 = vdwg.mxu0
        %v400 = vunpack.c.l.b16 %v245
        %v401 = vunpack.c.l.b16 %v246
        %v402 = vpack.c.b16 %v401, %v400
        %404 = vmatpush.bf16.msra.mxu0 0
        %405 = vmatpush.bf16.msra.mxu0 0
        %406 = vmatpush.bf16.msra.mxu0 0
        %407 = vmatpush.bf16.msra.mxu0 0
        %408 = vmatpush.bf16.msra.mxu0 0
        %409 = vmatpush.bf16.msra.mxu0 0
        %410 = vmatpush.bf16.msra.mxu0 0
        %411 = vmatpush.bf16.msra.mxu0 %v402
        %412 = vmatmul.bf16.gmra.mxu0 %v262
        %v413 = vpop.f32.mrf.mxu0
        %v414 = vadd.f32 0.0, %v413
        %v415 = vpop.f32.mrf.mxu0
        %v416 = vadd.f32 0.0, %v415
        %417 = vdwg.mxu0
        %v418 = vpack.c.bf16 %v276, %v274
        %v419 = vpack.c.bf16 %v296, %v294
        %v420 = vpack.c.bf16 %v316, %v314
        %v421 = vpack.c.bf16 %v336, %v334
        %v422 = vpack.c.bf16 %v356, %v354
        %v423 = vpack.c.bf16 %v376, %v374
        %v424 = vpack.c.bf16 %v396, %v394
        %v425 = vpack.c.bf16 %v416, %v414
        %v426 = vld [vmem:[%s2] sm:$0x3]
        %vm427 = vcmask 31744
        %v429 = vsel %vm427, %v418, 0
        %v432 = vsel %vm427, %v419, 0
        %v435 = vsel %vm427, %v420, 0
        %v438 = vsel %vm427, %v421, 0
        %v441 = vsel %vm427, %v422, 0
        %v444 = vsel %vm427, %v423, 0
        %v447 = vsel %vm427, %v424, 0
        %v450 = vsel %vm427, %v425, 0
        %vm452 = vcmask 1041408
        %v454 = vsel %vm452, %v426, 0
        %456 = vmatpush.bf16.msra.mxu0 0
        %457 = vmatpush.bf16.msra.mxu0 0
        %458 = vmatpush.bf16.msra.mxu0 0
        %459 = vmatpush.bf16.msra.mxu0 0
        %460 = vmatpush.bf16.msra.mxu0 0
        %461 = vmatpush.bf16.msra.mxu0 0
        %462 = vmatpush.bf16.msra.mxu0 0
        %463 = vmatpush.bf16.msra.mxu0 %v454
        %464 = vmatmul.bf16.gmra.mxu0 %v429
        %v465 = vpop.f32.mrf.mxu0
        %v466 = vadd.f32 0.0, %v465
        %v467 = vpop.f32.mrf.mxu0
        %v468 = vadd.f32 0.0, %v467
        %469 = vmatmul.bf16.gmra.mxu0 %v432
        %v470 = vpop.f32.mrf.mxu0
        %v471 = vadd.f32 0.0, %v470
        %v472 = vpop.f32.mrf.mxu0
        %v473 = vadd.f32 0.0, %v472
        %474 = vmatmul.bf16.gmra.mxu0 %v435
        %v475 = vpop.f32.mrf.mxu0
        %v476 = vadd.f32 0.0, %v475
        %v477 = vpop.f32.mrf.mxu0
        %v478 = vadd.f32 0.0, %v477
        %479 = vmatmul.bf16.gmra.mxu0 %v438
        %v480 = vpop.f32.mrf.mxu0
        %v481 = vadd.f32 0.0, %v480
        %v482 = vpop.f32.mrf.mxu0
        %v483 = vadd.f32 0.0, %v482
        %484 = vmatmul.bf16.gmra.mxu0 %v441
        %v485 = vpop.f32.mrf.mxu0
        %v486 = vadd.f32 0.0, %v485
        %v487 = vpop.f32.mrf.mxu0
        %v488 = vadd.f32 0.0, %v487
        %489 = vmatmul.bf16.gmra.mxu0 %v444
        %v490 = vpop.f32.mrf.mxu0
        %v491 = vadd.f32 0.0, %v490
        %v492 = vpop.f32.mrf.mxu0
        %v493 = vadd.f32 0.0, %v492
        %494 = vmatmul.bf16.gmra.mxu0 %v447
        %v495 = vpop.f32.mrf.mxu0
        %v496 = vadd.f32 0.0, %v495
        %v497 = vpop.f32.mrf.mxu0
        %v498 = vadd.f32 0.0, %v497
        %499 = vmatmul.bf16.gmra.mxu0 %v450
        %v500 = vpop.f32.mrf.mxu0
        %v501 = vadd.f32 0.0, %v500
        %v502 = vpop.f32.mrf.mxu0
        %v503 = vadd.f32 0.0, %v502
        %504 = vdwg.mxu0
        %v505 = vld [vmem:[%s3] sm:$0xff]
        %v506 = vld [vmem:[%s3 + $0x8] sm:$0xff]
        %v507 = vadd.f32 %v466, %v505
        %v508 = vadd.f32 %v468, %v506
        %v509 = vadd.f32 %v471, %v505
        %v510 = vadd.f32 %v473, %v506
        %v511 = vadd.f32 %v476, %v505
        %v512 = vadd.f32 %v478, %v506
        %v513 = vadd.f32 %v481, %v505
        %v514 = vadd.f32 %v483, %v506
        %v515 = vadd.f32 %v486, %v505
        %v516 = vadd.f32 %v488, %v506
        %v517 = vadd.f32 %v491, %v505
        %v518 = vadd.f32 %v493, %v506
        %v519 = vadd.f32 %v496, %v505
        %v520 = vadd.f32 %v498, %v506
        %v521 = vadd.f32 %v501, %v505
        %v522 = vadd.f32 %v503, %v506
        %523 = vst [vmem:[%s217] sm:$0xff] %v507
        %524 = vst [vmem:[%s217 + $0x8] sm:$0xff] %v508
        %525 = vst [vmem:[%s217 + $0x10] sm:$0xff] %v509
        %526 = vst [vmem:[%s217 + $0x18] sm:$0xff] %v510
        %527 = vst [vmem:[%s217 + $0x20] sm:$0xff] %v511
        %528 = vst [vmem:[%s217 + $0x28] sm:$0xff] %v512
        %529 = vst [vmem:[%s217 + $0x30] sm:$0xff] %v513
        %530 = vst [vmem:[%s217 + $0x38] sm:$0xff] %v514
        %531 = vst [vmem:[%s217 + $0x40] sm:$0xff] %v515
        %532 = vst [vmem:[%s217 + $0x48] sm:$0xff] %v516
        %533 = vst [vmem:[%s217 + $0x50] sm:$0xff] %v517
        %534 = vst [vmem:[%s217 + $0x58] sm:$0xff] %v518
        %535 = vst [vmem:[%s217 + $0x60] sm:$0xff] %v519
        %536 = vst [vmem:[%s217 + $0x68] sm:$0xff] %v520
        %537 = vst [vmem:[%s217 + $0x70] sm:$0xff] %v521
        %538 = vst [vmem:[%s217 + $0x78] sm:$0xff] %v522
        %s539 = sand.u32 %s131, 1
        %s540 = scalar_lea.sflag [#allocation3], %s539
        %s541 = sand.u32 %s131, 1
        %s542 = smul.addr %s541, 128
        %s543 = scalar_lea.vmem [#allocation2], %s542
        // Predicated region
        $region37: #{tpu_custom_call.1} parent=35 // pred_check
          %p544 = pneg %p141
        $region38: #{tpu_custom_call.1} parent=35 // pred_check_branch
          %546 = sbr.rel (%p544) target = $region40
        $region39: #{tpu_custom_call.1} parent=35 // pred_region
          %s547 = smul.u32 8, %s23
          %549 = vsyncadd %s540, 0
          %s550 = smul.addr %s547, 2
          %s551 = smul.addr %s22, 16
          %s552 = sadd.s32 %s550, %s551
          %s553 = smul.addr %s552, 8
          %s554 = scalar_lea.hbm %s4, %s553
          %s555 = sshll.u32 %s543, 4
          %s556 = int_to_ptr.vmem [resolvable:$true] %s555
          %s557 = sshll.u32 %s554, 4
          %s558 = int_to_ptr.hbm [resolvable:$true] %s557
          %563 = dma.vmem_to_hbm [thread:$0]  %s556, 2048, %s558, %s540, 128, 128, 8
        $region40: #{tpu_custom_call.1} parent=35 // pred_fallthru
          _
      $region36: #{tpu_custom_call.1} parent=5 // pred_fallthru
        _
      %p564 = scmp.le.s32.totalorder 2, %s13
      // Predicated region
      $region41: #{tpu_custom_call.1} parent=5 // pred_check
        %p565 = pneg %p564
      $region42: #{tpu_custom_call.1} parent=5 // pred_check_branch
        %567 = sbr.rel (%p565) target = $region44
      $region43: #{tpu_custom_call.1} parent=5 // pred_region
        %s568 = ssub.s32 %s13, 2
        // Predicated region
        $region45: #{tpu_custom_call.1} parent=43 // pred_check
          %p569 = pneg %p147
        $region46: #{tpu_custom_call.1} parent=43 // pred_check_branch
          %571 = sbr.rel (%p569) target = $region48
        $region47: #{tpu_custom_call.1} parent=43 // pred_region
          %s572 = sand.u32 %s132, 1
          %s573 = scalar_lea.sflag [#allocation3], %s572
          %s574 = sand.u32 %s132, 1
          %s575 = smul.addr %s574, 128
          %s576 = scalar_lea.vmem [#allocation2], %s575
          %578 = dma.done %s573, 2048
        $region48: #{tpu_custom_call.1} parent=43 // pred_fallthru
          _
      $region44: #{tpu_custom_call.1} parent=5 // pred_fallthru
        _
    $region6: #{tpu_custom_call.1} parent=1 // loop_footer
      %s17 = sadd.s32 1, %s13
    $region7: #{tpu_custom_call.1} parent=1 // loop_footer_branch
      %12 = sbr.rel target = $region3
    $region8: #{tpu_custom_call.1} parent=1 // loop_exit
      _
    %579 = vsyncpa [#allocation3], 1
    %s580 = scalar_lea.sflag [#allocation3], 1
    %581 = vsyncpa %s580, 1

</llo_original>
